<compile_context>
chip_gen: v6e
topology: v6e:2x2x1
jax: 0.10.0
libtpu: 0.0.40
codegen_flags: <defaults>
</compile_context>

<pallas_src>
import functools

import jax
import jax.numpy as jnp
from jax.experimental import pallas as pl
from jax.experimental.pallas import tpu as pltpu


def _ca_kernel(x_ref, w1t_ref, b1_ref, w2t_ref, b2_ref, o_ref, *, inv_hw):
    # x_ref block: (Bn, C, HW).  Weights/biases are full, lane-major arrays.

    # AdaptiveAvgPool2d(1): one cross-lane sum + compile-time 1/HW scale.
    pooled = jnp.sum(x_ref[...].astype(jnp.float32), axis=2) * inv_hw      # (Bn, C)

    # 1x1 conv (C -> Cr) + bias + ReLU   (outputs land lane-major).
    h = jnp.dot(pooled, w1t_ref[...], preferred_element_type=jnp.float32)
    h = jnp.maximum(h + b1_ref[...], 0.0)                                  # (Bn, Cr)

    # 1x1 conv (Cr -> C) + bias + Sigmoid.
    y = jnp.dot(h, w2t_ref[...], preferred_element_type=jnp.float32)
    y = jax.nn.sigmoid(y + b2_ref[...])                                    # (Bn, C)

    # Channel-wise rescale: re-read the VMEM block so no (Bn, C, HW) value
    # stays live across the attention chain (keeps vreg pressure low).
    o_ref[...] = x_ref[...] * y.astype(o_ref.dtype)[:, :, None]


def _pick_bn(n, c, hw, itemsize, max_block_bytes=8 * 1024 * 1024):
    """Largest divisor of N whose (Bn, C, HW) block fits the VMEM budget,
    while keeping >= 2 grid steps when possible (v7x 2-TC sharding)."""
    best = 1
    for bn in range(1, n + 1):
        if n % bn:
            continue
        if bn * c * hw * itemsize > max_block_bytes:
            continue
        if n >= 2 and bn != 1 and (n // bn) < 2:
            continue  # would collapse to a single grid step
        best = bn
    return best


def ca_layer(x, w1, b1, w2, b2):
    """x: (N, C, H, W).  w1: (Cr, C), b1: (Cr,), w2: (C, Cr), b2: (C,)."""
    N, C, H, W = x.shape
    Cr = w1.shape[0]
    HW = H * W

    x_flat = x.reshape(N, C, HW)
    # Transposed weights + lane-major biases so the tiny SE path is pure
    # full-width VPU/MXU work with C / Cr on the lane axis.
    w1t = jnp.asarray(w1, jnp.float32).T            # (C, Cr)
    w2t = jnp.asarray(w2, jnp.float32).T            # (Cr, C)
    b1_row = jnp.asarray(b1, jnp.float32).reshape(1, Cr)
    b2_row = jnp.asarray(b2, jnp.float32).reshape(1, C)

    bn = _pick_bn(N, C, HW, x.dtype.itemsize)
    grid = (N // bn,)

    # TODO(synk): for very large H*W (block > ~10 MiB at Bn=1) a two-pass
    # design (pool kernel, then HW-tiled rescale kernel) is needed for v7x.

    kernel = functools.partial(_ca_kernel, inv_hw=float(1.0 / HW))

    out_flat = pl.pallas_call(
        kernel,
        out_shape=jax.ShapeDtypeStruct((N, C, HW), x.dtype),
        grid_spec=pltpu.PrefetchScalarGridSpec(
            num_scalar_prefetch=0,
            grid=grid,
            in_specs=[
                pl.BlockSpec((bn, C, HW), lambda n: (n, 0, 0)),   # x
                pl.BlockSpec((C, Cr), lambda n: (0, 0)),          # w1.T
                pl.BlockSpec((1, Cr), lambda n: (0, 0)),          # b1
                pl.BlockSpec((Cr, C), lambda n: (0, 0)),          # w2.T
                pl.BlockSpec((1, C), lambda n: (0, 0)),           # b2
            ],
            out_specs=pl.BlockSpec((bn, C, HW), lambda n: (n, 0, 0)),
        ),
        compiler_params=pltpu.CompilerParams(
            dimension_semantics=("parallel",),
            vmem_limit_bytes=48 * 1024 * 1024,
        ),
    )(x_flat, w1t, b1_row, w2t, b2_row)

    return out_flat.reshape(N, C, H, W)


def ca_layer_ref(x, w1, b1, w2, b2):
    """Pure-JAX reference matching the PyTorch forward."""
    pooled = jnp.mean(x, axis=(2, 3))                         # (N, C)
    h = jnp.maximum(pooled @ w1.T + b1, 0.0)                  # (N, Cr)
    y = jax.nn.sigmoid(h @ w2.T + b2)                         # (N, C)
    return x * y[:, :, None, None]


if __name__ == "__main__":
    # Module-consistent shapes: channel=64, reduction=16 -> hidden=4.
    # H=W=16 gives HW=256 (lane-dense, multiple of 128); N=4 -> Bn=2, grid=2.
    N, C, H, W = 4, 64, 16, 16
    reduction = 16
    Cr = C // reduction

    key = jax.random.PRNGKey(0)
    kx, k1, k2, k3, k4 = jax.random.split(key, 5)

    x = jax.random.normal(kx, (N, C, H, W), dtype=jnp.float32)
    # Conv2d(channel, channel//r, 1) weight: (Cr, C, 1, 1) -> squeeze to (Cr, C)
    w1 = jax.random.normal(k1, (Cr, C), dtype=jnp.float32) * 0.1
    b1 = jax.random.normal(k2, (Cr,), dtype=jnp.float32) * 0.1
    # Conv2d(channel//r, channel, 1) weight: (C, Cr, 1, 1) -> squeeze to (C, Cr)
    w2 = jax.random.normal(k3, (C, Cr), dtype=jnp.float32) * 0.1
    b2 = jax.random.normal(k4, (C,), dtype=jnp.float32) * 0.1

    out = jax.block_until_ready(ca_layer(x, w1, b1, w2, b2))
    ref = ca_layer_ref(x, w1, b1, w2, b2)

    assert out.shape == (N, C, H, W)
    assert jnp.allclose(out, ref, atol=1e-5, rtol=1e-5)

    print("KERNEL_OK")
</pallas_src>

<mosaic_0001>
module attributes {stable_mosaic.version = 11 : i64} {
  func.func @_ca_kernel(%arg0: i32, %arg1: memref<2x64x256xf32, #tpu.memory_space<vmem>>, %arg2: memref<64x4xf32, #tpu.memory_space<vmem>>, %arg3: memref<1x4xf32, #tpu.memory_space<vmem>>, %arg4: memref<4x64xf32, #tpu.memory_space<vmem>>, %arg5: memref<1x64xf32, #tpu.memory_space<vmem>>, %arg6: memref<2x64x256xf32, #tpu.memory_space<vmem>>) attributes {dimension_semantics = [#tpu.dimension_semantics<parallel>], iteration_bounds = array<i64: 2>, scalar_prefetch = 0 : i64, scratch_operands = 0 : i64, tpu.core_type = #tpu.core_type<tc>, window_params = [{transform_indices = @transform_0, window_bounds = array<i64: 2, 64, 256>}, {pipeline_mode = #tpu.pipeline_mode<synchronous>, transform_indices = @transform_1, window_bounds = array<i64: 64, 4>}, {pipeline_mode = #tpu.pipeline_mode<synchronous>, transform_indices = @transform_2, window_bounds = array<i64: 1, 4>}, {pipeline_mode = #tpu.pipeline_mode<synchronous>, transform_indices = @transform_3, window_bounds = array<i64: 4, 64>}, {pipeline_mode = #tpu.pipeline_mode<synchronous>, transform_indices = @transform_4, window_bounds = array<i64: 1, 64>}, {transform_indices = @transform_5, window_bounds = array<i64: 2, 64, 256>}]} {
    %c0 = arith.constant 0 : index
    %c0_0 = arith.constant 0 : index
    %c0_1 = arith.constant 0 : index
    %0 = vector.load %arg1[%c0, %c0_0, %c0_1] : memref<2x64x256xf32, #tpu.memory_space<vmem>>, vector<2x64x256xf32>
    %cst = arith.constant dense<0.000000e+00> : vector<2x64xf32>
    %1 = vector.multi_reduction <add>, %0, %cst [2] : vector<2x64x256xf32> to vector<2x64xf32>
    %cst_2 = arith.constant 3.906250e-03 : f32
    %2 = vector.broadcast %cst_2 : f32 to vector<2x64xf32>
    %3 = arith.mulf %1, %2 : vector<2x64xf32>
    %c0_3 = arith.constant 0 : index
    %c0_4 = arith.constant 0 : index
    %4 = vector.load %arg2[%c0_3, %c0_4] : memref<64x4xf32, #tpu.memory_space<vmem>>, vector<64x4xf32>
    %cst_5 = arith.constant dense<0.000000e+00> : vector<2x4xf32>
    %5 = tpu.matmul %3, %4, %cst_5 {dimension_numbers = #tpu.dot_dimension_numbers<[1], [0], [0], [1], [0, 0, 1, 1], [], []>} : vector<2x64xf32>, vector<64x4xf32>, vector<2x4xf32> -> vector<2x4xf32>
    %c0_6 = arith.constant 0 : index
    %c0_7 = arith.constant 0 : index
    %6 = vector.load %arg3[%c0_6, %c0_7] : memref<1x4xf32, #tpu.memory_space<vmem>>, vector<1x4xf32>
    %7 = vector.broadcast %6 : vector<1x4xf32> to vector<2x4xf32>
    %8 = arith.addf %5, %7 : vector<2x4xf32>
    %cst_8 = arith.constant 0.000000e+00 : f32
    %9 = vector.broadcast %cst_8 : f32 to vector<2x4xf32>
    %10 = arith.maximumf %8, %9 : vector<2x4xf32>
    %c0_9 = arith.constant 0 : index
    %c0_10 = arith.constant 0 : index
    %11 = vector.load %arg4[%c0_9, %c0_10] : memref<4x64xf32, #tpu.memory_space<vmem>>, vector<4x64xf32>
    %cst_11 = arith.constant dense<0.000000e+00> : vector<2x64xf32>
    %12 = tpu.matmul %10, %11, %cst_11 {dimension_numbers = #tpu.dot_dimension_numbers<[1], [0], [0], [1], [0, 0, 1, 1], [], []>} : vector<2x4xf32>, vector<4x64xf32>, vector<2x64xf32> -> vector<2x64xf32>
    %c0_12 = arith.constant 0 : index
    %c0_13 = arith.constant 0 : index
    %13 = vector.load %arg5[%c0_12, %c0_13] : memref<1x64xf32, #tpu.memory_space<vmem>>, vector<1x64xf32>
    %14 = vector.broadcast %13 : vector<1x64xf32> to vector<2x64xf32>
    %15 = arith.addf %12, %14 : vector<2x64xf32>
    %16 = arith.negf %15 : vector<2x64xf32>
    %17 = math.exp %16 : vector<2x64xf32>
    %cst_14 = arith.constant 1.000000e+00 : f32
    %18 = vector.broadcast %cst_14 : f32 to vector<2x64xf32>
    %19 = arith.addf %18, %17 : vector<2x64xf32>
    %20 = arith.divf %18, %19 : vector<2x64xf32>
    %c0_15 = arith.constant 0 : index
    %c0_16 = arith.constant 0 : index
    %c0_17 = arith.constant 0 : index
    %21 = vector.load %arg1[%c0_15, %c0_16, %c0_17] : memref<2x64x256xf32, #tpu.memory_space<vmem>>, vector<2x64x256xf32>
    %22 = vector.shape_cast %20 : vector<2x64xf32> to vector<2x64x1xf32>
    %23 = vector.broadcast %22 : vector<2x64x1xf32> to vector<2x64x256xf32>
    %24 = arith.mulf %21, %23 : vector<2x64x256xf32>
    %c0_18 = arith.constant 0 : index
    %c0_19 = arith.constant 0 : index
    %c0_20 = arith.constant 0 : index
    %25 = vector.load %arg6[%c0_18, %c0_19, %c0_20] : memref<2x64x256xf32, #tpu.memory_space<vmem>>, vector<2x64x256xf32>
    tpu.vector_store %arg6[%c0_18, %c0_19, %c0_20], %24 {strides = array<i32>} : memref<2x64x256xf32, #tpu.memory_space<vmem>>, vector<2x64x256xf32>,
    return
  }
  func.func @transform_0(%arg0: i32) -> (i32, i32, i32) {
    %c0_i32 = arith.constant 0 : i32
    %c0_i32_0 = arith.constant 0 : i32
    %c0_i32_1 = arith.constant 0 : i32
    return %arg0, %c0_i32, %c0_i32_0 : i32, i32, i32
  }
  func.func @transform_1(%arg0: i32) -> (i32, i32) {
    %c0_i32 = arith.constant 0 : i32
    %c0_i32_0 = arith.constant 0 : i32
    %c0_i32_1 = arith.constant 0 : i32
    return %c0_i32, %c0_i32_0 : i32, i32
  }
  func.func @transform_2(%arg0: i32) -> (i32, i32) {
    %c0_i32 = arith.constant 0 : i32
    %c0_i32_0 = arith.constant 0 : i32
    %c0_i32_1 = arith.constant 0 : i32
    return %c0_i32, %c0_i32_0 : i32, i32
  }
  func.func @transform_3(%arg0: i32) -> (i32, i32) {
    %c0_i32 = arith.constant 0 : i32
    %c0_i32_0 = arith.constant 0 : i32
    %c0_i32_1 = arith.constant 0 : i32
    return %c0_i32, %c0_i32_0 : i32, i32
  }
  func.func @transform_4(%arg0: i32) -> (i32, i32) {
    %c0_i32 = arith.constant 0 : i32
    %c0_i32_0 = arith.constant 0 : i32
    %c0_i32_1 = arith.constant 0 : i32
    return %c0_i32, %c0_i32_0 : i32, i32
  }
  func.func @transform_5(%arg0: i32) -> (i32, i32, i32) {
    %c0_i32 = arith.constant 0 : i32
    %c0_i32_0 = arith.constant 0 : i32
    %c0_i32_1 = arith.constant 0 : i32
    return %arg0, %c0_i32, %c0_i32_0 : i32, i32, i32
  }
}

</mosaic_0001>

<llo_original>
// kernel: tpu_custom_call.1
$region0: #{tpu_custom_call.1}
  #allocation0 [shape = 'u32[]', space=smem, size = 0x4, offset = 0x4, fixed_abs, tag = 'smem constant byte address 0x4 - core index']
  #allocation1 [shape = 'u32[144,128]{1,0:T(1,128)}', space=vmem, size = 0x12000, scoped, tag = 'internal scratch']
  %s0 = inlined_call_operand.hbm [shape: f32[4,64,256], index: 0, kind: input, shape index: {}]
  %s1 = inlined_call_operand.vmem [shape: f32[64,4], index: 1, kind: input, shape index: {}]
  %s2 = inlined_call_operand.vmem [shape: f32[1,4], index: 2, kind: input, shape index: {}]
  %s3 = inlined_call_operand.vmem [shape: f32[4,64], index: 3, kind: input, shape index: {}]
  %s4 = inlined_call_operand.vmem [shape: f32[1,64], index: 4, kind: input, shape index: {}]
  %s5 = inlined_call_operand.hbm [shape: f32[4,64,256], index: 5, kind: output, shape index: {}]
  %s6 = sld [smem:[#allocation0]]
  $region57: #{tpu_custom_call.1} parent=0
    _
  %s8 = ssub.s32 1, %s6
  %s9 = scalar_select 0, %s8, %s6
  $region1: #{tpu_custom_call.1} parent=0
    #allocation2 [shape = 'u8[262144]{0}', space=vmem, size = 0x40000, scoped, tag = 'input window, operand 0']
    #allocation3 [shape = 's32[2]{0}', space=sflag, size = 0x8, scoped, tag = 'scoped memory for tpu_custom_call.1']
    #allocation4 [shape = 's32[2]{0}', space=sflag, size = 0x8, scoped, tag = 'scoped memory for tpu_custom_call.1']
    #allocation5 [shape = 'u8[262144]{0}', space=vmem, size = 0x40000, scoped, tag = 'output window, operand 0']
    %10 = vsyncpa [#allocation3], 0
    %s11 = scalar_lea.sflag [#allocation3], 1
    %12 = vsyncpa %s11, 0
    %13 = vsyncpa [#allocation4], 0
    %s14 = scalar_lea.sflag [#allocation4], 1
    %15 = vsyncpa %s14, 0
    loop: start=0, step=1, limit=4
    $region2: #{tpu_custom_call.1} parent=1 // loop_pre_header
      _
    $region3: #{tpu_custom_call.1} parent=1 // loop_header
      %s17 = sphi 0, %s21
      %p18 = scmp.ge.s32.totalorder %s17, 4
      %s27 = sphi 0, %s29
      %s30 = sphi 0, %s27
      %s31 = sphi 0, %s30
      %s47 = sphi 0, %s31
      %s51 = sphi 0, %s51
      %s53 = sphi 0, %s51
      %s54 = sphi 0, %s53
      %s68 = sphi 0, %s54
      %s72 = sphi 0, %s72
      %s74 = sphi 0, %s72
      %s75 = sphi 0, %s74
      %s89 = sphi 0, %s75
      %s93 = sphi 0, %s93
      %s95 = sphi 0, %s93
      %s96 = sphi 0, %s95
      %s110 = sphi 0, %s96
      %s114 = sphi 0, %s114
      %s116 = sphi 0, %s114
      %s117 = sphi 0, %s116
      %s131 = sphi 0, %s117
      %s137 = sphi 0, %s139
      %s140 = sphi 0, %s137
      %s141 = sphi 0, %s140
      %s157 = sphi 0, %s141
    $region4: #{tpu_custom_call.1} parent=1 // loop_header_branch
      %20 = sbr.rel (%p18) target = $region8
    $region5: #{tpu_custom_call.1} parent=1 // loop_body
      %s22 = ssub.s32 %s17, 1
      %s23 = ssub.s32 %s17, 2
      %s24 = sadd.s32 %s17, 1
      %s25 = ssub.s32 %s17, %s24
      %p26 = scmp.eq.s32.totalorder %s25, 0
      %s28 = sadd.s32 %s27, 1
      %s29 = scalar_select %p26, %s27, %s28
      %p32 = pneg %p26
      %p33 = scmp.eq.s32.totalorder %s17, 1
      %p34 = por %p32, %p33
      %p35 = scmp.ne.s32.totalorder %s27, %s30
      %p36 = scmp.eq.s32.totalorder %s17, 0
      %p37 = por %p35, %p36
      %p38 = scmp.ne.s32.totalorder %s27, %s30
      %p39 = scmp.eq.s32.totalorder %s22, 1
      %p40 = por %p38, %p39
      %p41 = scmp.ne.s32.totalorder %s30, %s31
      %p42 = scmp.eq.s32.totalorder %s22, 0
      %p43 = por %p41, %p42
      %p44 = scmp.ne.s32.totalorder %s30, %s31
      %p45 = scmp.eq.s32.totalorder %s23, 1
      %p46 = por %p44, %p45
      %p48 = scmp.ne.s32.totalorder %s31, %s47
      %p49 = scmp.eq.s32.totalorder %s23, 0
      %p50 = por %p48, %p49
      %s52 = sadd.s32 %s51, 1
      %p55 = scmp.eq.s32.totalorder %s17, 1
      %p56 = scmp.ne.s32.totalorder %s51, %s53
      %p57 = scmp.eq.s32.totalorder %s17, 0
      %p58 = por %p56, %p57
      %p59 = scmp.ne.s32.totalorder %s51, %s53
      %p60 = scmp.eq.s32.totalorder %s22, 1
      %p61 = por %p59, %p60
      %p62 = scmp.ne.s32.totalorder %s53, %s54
      %p63 = scmp.eq.s32.totalorder %s22, 0
      %p64 = por %p62, %p63
      %p65 = scmp.ne.s32.totalorder %s53, %s54
      %p66 = scmp.eq.s32.totalorder %s23, 1
      %p67 = por %p65, %p66
      %p69 = scmp.ne.s32.totalorder %s54, %s68
      %p70 = scmp.eq.s32.totalorder %s23, 0
      %p71 = por %p69, %p70
      %s73 = sadd.s32 %s72, 1
      %p76 = scmp.eq.s32.totalorder %s17, 1
      %p77 = scmp.ne.s32.totalorder %s72, %s74
      %p78 = scmp.eq.s32.totalorder %s17, 0
      %p79 = por %p77, %p78
      %p80 = scmp.ne.s32.totalorder %s72, %s74
      %p81 = scmp.eq.s32.totalorder %s22, 1
      %p82 = por %p80, %p81
      %p83 = scmp.ne.s32.totalorder %s74, %s75
      %p84 = scmp.eq.s32.totalorder %s22, 0
      %p85 = por %p83, %p84
      %p86 = scmp.ne.s32.totalorder %s74, %s75
      %p87 = scmp.eq.s32.totalorder %s23, 1
      %p88 = por %p86, %p87
      %p90 = scmp.ne.s32.totalorder %s75, %s89
      %p91 = scmp.eq.s32.totalorder %s23, 0
      %p92 = por %p90, %p91
      %s94 = sadd.s32 %s93, 1
      %p97 = scmp.eq.s32.totalorder %s17, 1
      %p98 = scmp.ne.s32.totalorder %s93, %s95
      %p99 = scmp.eq.s32.totalorder %s17, 0
      %p100 = por %p98, %p99
      %p101 = scmp.ne.s32.totalorder %s93, %s95
      %p102 = scmp.eq.s32.totalorder %s22, 1
      %p103 = por %p101, %p102
      %p104 = scmp.ne.s32.totalorder %s95, %s96
      %p105 = scmp.eq.s32.totalorder %s22, 0
      %p106 = por %p104, %p105
      %p107 = scmp.ne.s32.totalorder %s95, %s96
      %p108 = scmp.eq.s32.totalorder %s23, 1
      %p109 = por %p107, %p108
      %p111 = scmp.ne.s32.totalorder %s96, %s110
      %p112 = scmp.eq.s32.totalorder %s23, 0
      %p113 = por %p111, %p112
      %s115 = sadd.s32 %s114, 1
      %p118 = scmp.eq.s32.totalorder %s17, 1
      %p119 = scmp.ne.s32.totalorder %s114, %s116
      %p120 = scmp.eq.s32.totalorder %s17, 0
      %p121 = por %p119, %p120
      %p122 = scmp.ne.s32.totalorder %s114, %s116
      %p123 = scmp.eq.s32.totalorder %s22, 1
      %p124 = por %p122, %p123
      %p125 = scmp.ne.s32.totalorder %s116, %s117
      %p126 = scmp.eq.s32.totalorder %s22, 0
      %p127 = por %p125, %p126
      %p128 = scmp.ne.s32.totalorder %s116, %s117
      %p129 = scmp.eq.s32.totalorder %s23, 1
      %p130 = por %p128, %p129
      %p132 = scmp.ne.s32.totalorder %s117, %s131
      %p133 = scmp.eq.s32.totalorder %s23, 0
      %p134 = por %p132, %p133
      %s135 = ssub.s32 %s17, %s24
      %p136 = scmp.eq.s32.totalorder %s135, 0
      %s138 = sadd.s32 %s137, 1
      %s139 = scalar_select %p136, %s137, %s138
      %p142 = pneg %p136
      %p143 = scmp.eq.s32.totalorder %s17, 1
      %p144 = por %p142, %p143
      %p145 = scmp.ne.s32.totalorder %s137, %s140
      %p146 = scmp.eq.s32.totalorder %s17, 0
      %p147 = por %p145, %p146
      %p148 = scmp.ne.s32.totalorder %s137, %s140
      %p149 = scmp.eq.s32.totalorder %s22, 1
      %p150 = por %p148, %p149
      %p151 = scmp.ne.s32.totalorder %s140, %s141
      %p152 = scmp.eq.s32.totalorder %s22, 0
      %p153 = por %p151, %p152
      %p154 = scmp.ne.s32.totalorder %s140, %s141
      %p155 = scmp.eq.s32.totalorder %s23, 1
      %p156 = por %p154, %p155
      %p158 = scmp.ne.s32.totalorder %s141, %s157
      %p159 = scmp.eq.s32.totalorder %s23, 0
      %p160 = por %p158, %p159
      %p161 = scmp.le.s32.totalorder 1, %s17
      %p162 = scmp.lt.s32.totalorder %s17, 3
      %p163 = pnand %p161, %p162
      %p164 = pneg %p163
      // Predicated region
      $region9: #{tpu_custom_call.1} parent=5 // pred_check
        _
      $region10: #{tpu_custom_call.1} parent=5 // pred_check_branch
        %166 = sbr.rel (%p163) target = $region12
      $region11: #{tpu_custom_call.1} parent=5 // pred_region
        %s167 = ssub.s32 %s17, 1
        // Predicated region
        $region13: #{tpu_custom_call.1} parent=11 // pred_check
          %p168 = pneg %p64
        $region14: #{tpu_custom_call.1} parent=11 // pred_check_branch
          %170 = sbr.rel (%p168) target = $region16
        $region15: #{tpu_custom_call.1} parent=11 // pred_region
          _
        $region16: #{tpu_custom_call.1} parent=11 // pred_fallthru
          _
        // Predicated region
        $region17: #{tpu_custom_call.1} parent=11 // pred_check
          %p171 = pneg %p85
        $region18: #{tpu_custom_call.1} parent=11 // pred_check_branch
          %173 = sbr.rel (%p171) target = $region20
        $region19: #{tpu_custom_call.1} parent=11 // pred_region
          _
        $region20: #{tpu_custom_call.1} parent=11 // pred_fallthru
          _
        // Predicated region
        $region21: #{tpu_custom_call.1} parent=11 // pred_check
          %p174 = pneg %p106
        $region22: #{tpu_custom_call.1} parent=11 // pred_check_branch
          %176 = sbr.rel (%p174) target = $region24
        $region23: #{tpu_custom_call.1} parent=11 // pred_region
          _
        $region24: #{tpu_custom_call.1} parent=11 // pred_fallthru
          _
        // Predicated region
        $region25: #{tpu_custom_call.1} parent=11 // pred_check
          %p177 = pneg %p127
        $region26: #{tpu_custom_call.1} parent=11 // pred_check_branch
          %179 = sbr.rel (%p177) target = $region28
        $region27: #{tpu_custom_call.1} parent=11 // pred_region
          _
        $region28: #{tpu_custom_call.1} parent=11 // pred_fallthru
          _
      $region12: #{tpu_custom_call.1} parent=5 // pred_fallthru
        _
      %p180 = scmp.lt.s32.totalorder %s17, 2
      // Predicated region
      $region29: #{tpu_custom_call.1} parent=5 // pred_check
        %p181 = pneg %p180
      $region30: #{tpu_custom_call.1} parent=5 // pred_check_branch
        %183 = sbr.rel (%p181) target = $region32
      $region31: #{tpu_custom_call.1} parent=5 // pred_region
        // Predicated region
        $region33: #{tpu_custom_call.1} parent=31 // pred_check
          %p184 = pneg %p37
        $region34: #{tpu_custom_call.1} parent=31 // pred_check_branch
          %186 = sbr.rel (%p184) target = $region36
        $region35: #{tpu_custom_call.1} parent=31 // pred_region
          %s187 = sand.u32 %s27, 1
          %s188 = scalar_lea.sflag [#allocation3], %s187
          %s189 = sand.u32 %s27, 1
          %s190 = smul.addr %s189, 256
          %s191 = scalar_lea.vmem [#allocation2], %s190
          %s192 = smul.u32 2, %s17
          %s194 = ssub.s32 4096, 4096
          %195 = vsyncadd %s188, %s194
          %s196 = smul.addr %s192, 16
          %s197 = smul.addr %s196, 128
          %s198 = scalar_lea.hbm %s0, %s197
          %s199 = sshll.u32 %s191, 4
          %s200 = int_to_ptr.vmem [resolvable:$true] %s199
          %205 = dma.hbm_to_vmem [thread:$0]  %s198, 4096, %s200, %s188, 256, 256, 16
        $region36: #{tpu_custom_call.1} parent=31 // pred_fallthru
          _
      $region32: #{tpu_custom_call.1} parent=5 // pred_fallthru
        _
      %p206 = scmp.le.s32.totalorder 1, %s17
      %p207 = scmp.lt.s32.totalorder %s17, 3
      %p208 = pnand %p206, %p207
      %p209 = pneg %p208
      // Predicated region
      $region37: #{tpu_custom_call.1} parent=5 // pred_check
        _
      $region38: #{tpu_custom_call.1} parent=5 // pred_check_branch
        %211 = sbr.rel (%p208) target = $region40
      $region39: #{tpu_custom_call.1} parent=5 // pred_region
        %s212 = ssub.s32 %s17, 1
        %s213 = sand.u32 %s30, 1
        %s214 = scalar_lea.sflag [#allocation3], %s213
        %s215 = sand.u32 %s30, 1
        %s216 = smul.addr %s215, 256
        %s217 = scalar_lea.vmem [#allocation2], %s216
        // Predicated region
        $region41: #{tpu_custom_call.1} parent=39 // pred_check
          %p218 = pneg %p43
        $region42: #{tpu_custom_call.1} parent=39 // pred_check_branch
          %220 = sbr.rel (%p218) target = $region44
        $region43: #{tpu_custom_call.1} parent=39 // pred_region
          %221 = dma.done %s214, 4096
        $region44: #{tpu_custom_call.1} parent=39 // pred_fallthru
          _
        %s222 = sand.u32 %s30, 1
        %s223 = scalar_lea.sflag [#allocation3], %s222
        %s224 = sand.u32 %s30, 1
        %s225 = smul.addr %s224, 256
        %s226 = scalar_lea.vmem [#allocation2], %s225
        %p227 = pneg %p43
        %p228 = pneg %p40
        %p229 = pneg %p64
        %p230 = pneg %p61
        %p231 = pneg %p85
        %p232 = pneg %p82
        %p233 = pneg %p106
        %p234 = pneg %p103
        %p235 = pneg %p127
        %p236 = pneg %p124
        %p237 = pneg %p153
        %p238 = pneg %p150
        %s239 = sand.u32 %s140, 1
        %s240 = scalar_lea.sflag [#allocation4], %s239
        %s241 = sand.u32 %s140, 1
        %s242 = smul.addr %s241, 256
        %s243 = scalar_lea.vmem [#allocation5], %s242
        %s244 = smul.u32 2, %s22
        %s245 = smul.u32 2, %s22
        %v246 = vld [vmem:[%s217] sm:$0xff]
        %v247 = vld [vmem:[%s217 + $0x8] sm:$0xff]
        %v248 = vld [vmem:[%s217 + $0x10] sm:$0xff]
        %v249 = vld [vmem:[%s217 + $0x18] sm:$0xff]
        %v250 = vld [vmem:[%s217 + $0x20] sm:$0xff]
        %v251 = vld [vmem:[%s217 + $0x28] sm:$0xff]
        %v252 = vld [vmem:[%s217 + $0x30] sm:$0xff]
        %v253 = vld [vmem:[%s217 + $0x38] sm:$0xff]
        %v254 = vld [vmem:[%s217 + $0x40] sm:$0xff]
        %v255 = vld [vmem:[%s217 + $0x48] sm:$0xff]
        %v256 = vld [vmem:[%s217 + $0x50] sm:$0xff]
        %v257 = vld [vmem:[%s217 + $0x58] sm:$0xff]
        %v258 = vld [vmem:[%s217 + $0x60] sm:$0xff]
        %v259 = vld [vmem:[%s217 + $0x68] sm:$0xff]
        %v260 = vld [vmem:[%s217 + $0x70] sm:$0xff]
        %v261 = vld [vmem:[%s217 + $0x78] sm:$0xff]
        %v262 = vld [vmem:[%s217 + $0x80] sm:$0xff]
        %v263 = vld [vmem:[%s217 + $0x88] sm:$0xff]
        %v264 = vld [vmem:[%s217 + $0x90] sm:$0xff]
        %v265 = vld [vmem:[%s217 + $0x98] sm:$0xff]
        %v266 = vld [vmem:[%s217 + $0xa0] sm:$0xff]
        %v267 = vld [vmem:[%s217 + $0xa8] sm:$0xff]
        %v268 = vld [vmem:[%s217 + $0xb0] sm:$0xff]
        %v269 = vld [vmem:[%s217 + $0xb8] sm:$0xff]
        %v270 = vld [vmem:[%s217 + $0xc0] sm:$0xff]
        %v271 = vld [vmem:[%s217 + $0xc8] sm:$0xff]
        %v272 = vld [vmem:[%s217 + $0xd0] sm:$0xff]
        %v273 = vld [vmem:[%s217 + $0xd8] sm:$0xff]
        %v274 = vld [vmem:[%s217 + $0xe0] sm:$0xff]
        %v275 = vld [vmem:[%s217 + $0xe8] sm:$0xff]
        %v276 = vld [vmem:[%s217 + $0xf0] sm:$0xff]
        %v277 = vld [vmem:[%s217 + $0xf8] sm:$0xff]
        %v278 = vadd.f32 %v246, %v247
        %279 = vadd.xlane.f32.xlu0 %v278
        %v280 = vpop.xlane.xlu0 %279
        %v281 = vadd.f32 %v248, %v249
        %282 = vadd.xlane.f32.xlu0 %v281
        %v283 = vpop.xlane.xlu0 %282
        %v284 = vadd.f32 %v250, %v251
        %285 = vadd.xlane.f32.xlu0 %v284
        %v286 = vpop.xlane.xlu0 %285
        %v287 = vadd.f32 %v252, %v253
        %288 = vadd.xlane.f32.xlu0 %v287
        %v289 = vpop.xlane.xlu0 %288
        %v290 = vadd.f32 %v254, %v255
        %291 = vadd.xlane.f32.xlu0 %v290
        %v292 = vpop.xlane.xlu0 %291
        %v293 = vadd.f32 %v256, %v257
        %294 = vadd.xlane.f32.xlu0 %v293
        %v295 = vpop.xlane.xlu0 %294
        %v296 = vadd.f32 %v258, %v259
        %297 = vadd.xlane.f32.xlu0 %v296
        %v298 = vpop.xlane.xlu0 %297
        %v299 = vadd.f32 %v260, %v261
        %300 = vadd.xlane.f32.xlu0 %v299
        %v301 = vpop.xlane.xlu0 %300
        %v302 = vadd.f32 %v262, %v263
        %303 = vadd.xlane.f32.xlu0 %v302
        %v304 = vpop.xlane.xlu0 %303
        %v305 = vadd.f32 %v264, %v265
        %306 = vadd.xlane.f32.xlu0 %v305
        %v307 = vpop.xlane.xlu0 %306
        %v308 = vadd.f32 %v266, %v267
        %309 = vadd.xlane.f32.xlu0 %v308
        %v310 = vpop.xlane.xlu0 %309
        %v311 = vadd.f32 %v268, %v269
        %312 = vadd.xlane.f32.xlu0 %v311
        %v313 = vpop.xlane.xlu0 %312
        %v314 = vadd.f32 %v270, %v271
        %315 = vadd.xlane.f32.xlu0 %v314
        %v316 = vpop.xlane.xlu0 %315
        %v317 = vadd.f32 %v272, %v273
        %318 = vadd.xlane.f32.xlu0 %v317
        %v319 = vpop.xlane.xlu0 %318
        %v320 = vadd.f32 %v274, %v275
        %321 = vadd.xlane.f32.xlu0 %v320
        %v322 = vpop.xlane.xlu0 %321
        %v323 = vadd.f32 %v276, %v277
        %324 = vadd.xlane.f32.xlu0 %v323
        %v325 = vpop.xlane.xlu0 %324
        %v326 = vmul.f32 %v280, 0.00390625
        %v327 = vmul.f32 %v283, 0.00390625
        %v328 = vmul.f32 %v286, 0.00390625
        %v329 = vmul.f32 %v289, 0.00390625
        %v330 = vmul.f32 %v292, 0.00390625
        %v331 = vmul.f32 %v295, 0.00390625
        %v332 = vmul.f32 %v298, 0.00390625
        %v333 = vmul.f32 %v301, 0.00390625
        %v334 = vmul.f32 %v304, 0.00390625
        %v335 = vmul.f32 %v307, 0.00390625
        %v336 = vmul.f32 %v310, 0.00390625
        %v337 = vmul.f32 %v313, 0.00390625
        %v338 = vmul.f32 %v316, 0.00390625
        %v339 = vmul.f32 %v319, 0.00390625
        %v340 = vmul.f32 %v322, 0.00390625
        %v341 = vmul.f32 %v325, 0.00390625
        %v342 = vld [vmem:[%s1] sm:$0xff]
        %v343 = vld [vmem:[%s1 + $0x8] sm:$0xff]
        %v344 = vld [vmem:[%s1 + $0x10] sm:$0xff]
        %v345 = vld [vmem:[%s1 + $0x18] sm:$0xff]
        %v346 = vld [vmem:[%s1 + $0x20] sm:$0xff]
        %v347 = vld [vmem:[%s1 + $0x28] sm:$0xff]
        %v348 = vld [vmem:[%s1 + $0x30] sm:$0xff]
        %v349 = vld [vmem:[%s1 + $0x38] sm:$0xff]
        %v350 = vld [vmem:[%s2] sm:$0x1]
        %v352 = vlaneseq
        %v353 = vshrl.u32 %v352, 7
        %v354 = vsub.s32 0, %v353
        %v355 = vrot.slane %v350, %v354
        %v373 = vlaneseq
        %v374 = vand.u32 %v373, 127
        %v375 = vlaneseq
        %v376 = vshrl.u32 %v375, 7
        %v377 = vsub.s32 %v374, %v376
        %v378 = vrot.slane %v326, %v377
        %v379 = vadd.s32 %v374, 4294967288
        %v380 = vlaneseq
        %v381 = vshrl.u32 %v380, 7
        %v382 = vsub.s32 %v379, %v381
        %v383 = vrot.slane %v327, %v382
        %vm384 = vcmask 130112
        %v385 = vsel %vm384, %v383, %v378
        %v386 = vadd.s32 %v374, 4294967280
        %v387 = vlaneseq
        %v388 = vshrl.u32 %v387, 7
        %v389 = vsub.s32 %v386, %v388
        %v390 = vrot.slane %v328, %v389
        %vm391 = vcmask 195712
        %v392 = vsel %vm391, %v390, %v385
        %v393 = vadd.s32 %v374, 4294967272
        %v394 = vlaneseq
        %v395 = vshrl.u32 %v394, 7
        %v396 = vsub.s32 %v393, %v395
        %v397 = vrot.slane %v329, %v396
        %vm398 = vcmask 261312
        %v399 = vsel %vm398, %v397, %v392
        %v400 = vadd.s32 %v374, 4294967264
        %v401 = vlaneseq
        %v402 = vshrl.u32 %v401, 7
        %v403 = vsub.s32 %v400, %v402
        %v404 = vrot.slane %v330, %v403
        %vm405 = vcmask 326912
        %v406 = vsel %vm405, %v404, %v399
        %v407 = vadd.s32 %v374, 4294967256
        %v408 = vlaneseq
        %v409 = vshrl.u32 %v408, 7
        %v410 = vsub.s32 %v407, %v409
        %v411 = vrot.slane %v331, %v410
        %vm412 = vcmask 392512
        %v413 = vsel %vm412, %v411, %v406
        %v414 = vadd.s32 %v374, 4294967248
        %v415 = vlaneseq
        %v416 = vshrl.u32 %v415, 7
        %v417 = vsub.s32 %v414, %v416
        %v418 = vrot.slane %v332, %v417
        %vm419 = vcmask 458112
        %v420 = vsel %vm419, %v418, %v413
        %v421 = vadd.s32 %v374, 4294967240
        %v422 = vlaneseq
        %v423 = vshrl.u32 %v422, 7
        %v424 = vsub.s32 %v421, %v423
        %v425 = vrot.slane %v333, %v424
        %vm426 = vcmask 523712
        %v427 = vsel %vm426, %v425, %v420
        %v428 = vlaneseq
        %v429 = vshrl.u32 %v428, 7
        %v430 = vsub.s32 %v374, %v429
        %v431 = vrot.slane %v334, %v430
        %v432 = vlaneseq
        %v433 = vshrl.u32 %v432, 7
        %v434 = vsub.s32 %v379, %v433
        %v435 = vrot.slane %v335, %v434
        %v436 = vsel %vm384, %v435, %v431
        %v437 = vlaneseq
        %v438 = vshrl.u32 %v437, 7
        %v439 = vsub.s32 %v386, %v438
        %v440 = vrot.slane %v336, %v439
        %v441 = vsel %vm391, %v440, %v436
        %v442 = vlaneseq
        %v443 = vshrl.u32 %v442, 7
        %v444 = vsub.s32 %v393, %v443
        %v445 = vrot.slane %v337, %v444
        %v446 = vsel %vm398, %v445, %v441
        %v447 = vlaneseq
        %v448 = vshrl.u32 %v447, 7
        %v449 = vsub.s32 %v400, %v448
        %v450 = vrot.slane %v338, %v449
        %v451 = vsel %vm405, %v450, %v446
        %v452 = vlaneseq
        %v453 = vshrl.u32 %v452, 7
        %v454 = vsub.s32 %v407, %v453
        %v455 = vrot.slane %v339, %v454
        %v456 = vsel %vm412, %v455, %v451
        %v457 = vlaneseq
        %v458 = vshrl.u32 %v457, 7
        %v459 = vsub.s32 %v414, %v458
        %v460 = vrot.slane %v340, %v459
        %v461 = vsel %vm419, %v460, %v456
        %v462 = vlaneseq
        %v463 = vshrl.u32 %v462, 7
        %v464 = vsub.s32 %v421, %v463
        %v465 = vrot.slane %v341, %v464
        %v466 = vsel %vm426, %v465, %v461
        %vm467 = vcmask 1041409
        %v468 = vsel %vm467, %v466, %v427
        %vm469 = vcmask 523264
        %v470 = vsel %vm469, %v468, 0
        %472 = vmatprep.subr.mxu0 0.0
        %473 = vmatpush1.msra.mxu0 0.0
        %474 = vmatprep.subr.mxu0 0.0
        %475 = vmatpush1.msra.mxu0 0.0
        %476 = vmatprep.subr.mxu0 0.0
        %477 = vmatpush1.msra.mxu0 0.0
        %478 = vmatprep.subr.mxu0 0.0
        %479 = vmatpush1.msra.mxu0 0.0
        %480 = vmatprep.subr.mxu0 0.0
        %481 = vmatpush1.msra.mxu0 0.0
        %482 = vmatprep.subr.mxu0 0.0
        %483 = vmatpush1.msra.mxu0 0.0
        %484 = vmatprep.subr.mxu0 0.0
        %485 = vmatpush1.msra.mxu0 0.0
        %486 = vmatprep.subr.mxu0 0.0
        %487 = vmatpush1.msra.mxu0 0.0
        %488 = vmatprep.subr.mxu0 0.0
        %489 = vmatpush1.msra.mxu0 %v349
        %490 = vmatprep.subr.mxu0 0.0
        %491 = vmatpush1.msra.mxu0 %v348
        %492 = vmatprep.subr.mxu0 0.0
        %493 = vmatpush1.msra.mxu0 %v347
        %494 = vmatprep.subr.mxu0 0.0
        %495 = vmatpush1.msra.mxu0 %v346
        %496 = vmatprep.subr.mxu0 0.0
        %497 = vmatpush1.msra.mxu0 %v345
        %498 = vmatprep.subr.mxu0 0.0
        %499 = vmatpush1.msra.mxu0 %v344
        %500 = vmatprep.subr.mxu0 0.0
        %501 = vmatpush1.msra.mxu0 %v343
        %502 = vmatprep.subr.mxu0 0.0
        %503 = vmatpush1.msra.mxu0 %v342
        %504 = vmatprep.subr.mxu0 0.0
        %505 = vmatpush2.msra.mxu0 0.0
        %506 = vmatprep.subr.mxu0 0.0
        %507 = vmatpush2.msra.mxu0 0.0
        %508 = vmatprep.subr.mxu0 0.0
        %509 = vmatpush2.msra.mxu0 0.0
        %510 = vmatprep.subr.mxu0 0.0
        %511 = vmatpush2.msra.mxu0 0.0
        %512 = vmatprep.subr.mxu0 0.0
        %513 = vmatpush2.msra.mxu0 0.0
        %514 = vmatprep.subr.mxu0 0.0
        %515 = vmatpush2.msra.mxu0 0.0
        %516 = vmatprep.subr.mxu0 0.0
        %517 = vmatpush2.msra.mxu0 0.0
        %518 = vmatprep.subr.mxu0 0.0
        %519 = vmatpush2.msra.mxu0 0.0
        %520 = vmatprep.subr.mxu0 0.0
        %521 = vmatpush2.msra.mxu0 0.0
        %522 = vmatprep.subr.mxu0 0.0
        %523 = vmatpush2.msra.mxu0 0.0
        %524 = vmatprep.subr.mxu0 0.0
        %525 = vmatpush2.msra.mxu0 0.0
        %526 = vmatprep.subr.mxu0 0.0
        %527 = vmatpush2.msra.mxu0 0.0
        %528 = vmatprep.subr.mxu0 0.0
        %529 = vmatpush2.msra.mxu0 0.0
        %530 = vmatprep.subr.mxu0 0.0
        %531 = vmatpush2.msra.mxu0 0.0
        %532 = vmatprep.subr.mxu0 0.0
        %533 = vmatpush2.msra.mxu0 0.0
        %534 = vmatprep.subr.mxu0 0.0
        %535 = vmatpush2.msra.mxu0 0.0
        %536 = vmatprep.mubr.f32.mxu0 0.0
        %537 = vmatmul.mubr.f32.gmra.mxu0 %v470
        %v538 = vpop.f32.mrf.mxu0
        %v539 = vadd.f32 %v355, %v538
        %v540 = vpop.f32.mrf.mxu0
        %541 = vdwg.mxu0
        %v542 = vmax.f32 %v539, 0.0
        %v543 = vld [vmem:[%s3] sm:$0xf]
        %v544 = vld [vmem:[%s4] sm:$0x1]
        %v546 = vlaneseq
        %v547 = vshrl.u32 %v546, 7
        %v548 = vsub.s32 0, %v547
        %v549 = vrot.slane %v544, %v548
        %vm551 = vcmask 31744
        %v553 = vsel %vm551, %v542, 0
        %vm555 = vcmask 1043456
        %v557 = vsel %vm555, %v543, 0
        %559 = vmatprep.subr.mxu0 0.0
        %560 = vmatpush1.msra.mxu0 0.0
        %561 = vmatprep.subr.mxu0 0.0
        %562 = vmatpush1.msra.mxu0 0.0
        %563 = vmatprep.subr.mxu0 0.0
        %564 = vmatpush1.msra.mxu0 0.0
        %565 = vmatprep.subr.mxu0 0.0
        %566 = vmatpush1.msra.mxu0 0.0
        %567 = vmatprep.subr.mxu0 0.0
        %568 = vmatpush1.msra.mxu0 0.0
        %569 = vmatprep.subr.mxu0 0.0
        %570 = vmatpush1.msra.mxu0 0.0
        %571 = vmatprep.subr.mxu0 0.0
        %572 = vmatpush1.msra.mxu0 0.0
        %573 = vmatprep.subr.mxu0 0.0
        %574 = vmatpush1.msra.mxu0 0.0
        %575 = vmatprep.subr.mxu0 0.0
        %576 = vmatpush1.msra.mxu0 0.0
        %577 = vmatprep.subr.mxu0 0.0
        %578 = vmatpush1.msra.mxu0 0.0
        %579 = vmatprep.subr.mxu0 0.0
        %580 = vmatpush1.msra.mxu0 0.0
        %581 = vmatprep.subr.mxu0 0.0
        %582 = vmatpush1.msra.mxu0 0.0
        %583 = vmatprep.subr.mxu0 0.0
        %584 = vmatpush1.msra.mxu0 0.0
        %585 = vmatprep.subr.mxu0 0.0
        %586 = vmatpush1.msra.mxu0 0.0
        %587 = vmatprep.subr.mxu0 0.0
        %588 = vmatpush1.msra.mxu0 0.0
        %589 = vmatprep.subr.mxu0 0.0
        %590 = vmatpush1.msra.mxu0 %v557
        %591 = vmatprep.subr.mxu0 0.0
        %592 = vmatpush2.msra.mxu0 0.0
        %593 = vmatprep.subr.mxu0 0.0
        %594 = vmatpush2.msra.mxu0 0.0
        %595 = vmatprep.subr.mxu0 0.0
        %596 = vmatpush2.msra.mxu0 0.0
        %597 = vmatprep.subr.mxu0 0.0
        %598 = vmatpush2.msra.mxu0 0.0
        %599 = vmatprep.subr.mxu0 0.0
        %600 = vmatpush2.msra.mxu0 0.0
        %601 = vmatprep.subr.mxu0 0.0
        %602 = vmatpush2.msra.mxu0 0.0
        %603 = vmatprep.subr.mxu0 0.0
        %604 = vmatpush2.msra.mxu0 0.0
        %605 = vmatprep.subr.mxu0 0.0
        %606 = vmatpush2.msra.mxu0 0.0
        %607 = vmatprep.subr.mxu0 0.0
        %608 = vmatpush2.msra.mxu0 0.0
        %609 = vmatprep.subr.mxu0 0.0
        %610 = vmatpush2.msra.mxu0 0.0
        %611 = vmatprep.subr.mxu0 0.0
        %612 = vmatpush2.msra.mxu0 0.0
        %613 = vmatprep.subr.mxu0 0.0
        %614 = vmatpush2.msra.mxu0 0.0
        %615 = vmatprep.subr.mxu0 0.0
        %616 = vmatpush2.msra.mxu0 0.0
        %617 = vmatprep.subr.mxu0 0.0
        %618 = vmatpush2.msra.mxu0 0.0
        %619 = vmatprep.subr.mxu0 0.0
        %620 = vmatpush2.msra.mxu0 0.0
        %621 = vmatprep.subr.mxu0 0.0
        %622 = vmatpush2.msra.mxu0 0.0
        %623 = vmatprep.mubr.f32.mxu0 0.0
        %624 = vmatmul.mubr.f32.gmra.mxu0 %v553
        %v625 = vpop.f32.mrf.mxu0
        %v626 = vadd.f32 %v549, %v625
        %v627 = vpop.f32.mrf.mxu0
        %628 = vdwg.mxu0
        %v629 = vxor.u32 %v626, 2147483648
        %v630 = vmul.f32 %v629, 1.442695
        %v631 = vpow.pop %v630
        %v632 = vadd.f32 %v631, 1.0
        %v633 = vrcp.pop %v632
        %v634 = vmul.f32 1.0, %v633
        %v635 = vlaneseq
        %v636 = vshrl.u32 %v635, 7
        %v637 = vsub.s32 0, %v636
        %v638 = vrot.slane %v634, %v637
        %640 = vbcast.lane.b32.xlu0 %v638, 256
        %v641 = vpop.permute.xlu0 %640
        %s643 = sor.u32 256, 8
        %644 = vbcast.lane.b32.xlu0 %v638, %s643
        %v645 = vpop.permute.xlu0 %644
        %s647 = sor.u32 256, 16
        %648 = vbcast.lane.b32.xlu0 %v638, %s647
        %v649 = vpop.permute.xlu0 %648
        %s651 = sor.u32 256, 24
        %652 = vbcast.lane.b32.xlu0 %v638, %s651
        %v653 = vpop.permute.xlu0 %652
        %s655 = sor.u32 256, 32
        %656 = vbcast.lane.b32.xlu0 %v638, %s655
        %v657 = vpop.permute.xlu0 %656
        %s659 = sor.u32 256, 40
        %660 = vbcast.lane.b32.xlu0 %v638, %s659
        %v661 = vpop.permute.xlu0 %660
        %s663 = sor.u32 256, 48
        %664 = vbcast.lane.b32.xlu0 %v638, %s663
        %v665 = vpop.permute.xlu0 %664
        %s667 = sor.u32 256, 56
        %668 = vbcast.lane.b32.xlu0 %v638, %s667
        %v669 = vpop.permute.xlu0 %668
        %v670 = vlaneseq
        %v671 = vshrl.u32 %v670, 7
        %v672 = vsub.s32 1, %v671
        %v673 = vrot.slane %v634, %v672
        %675 = vbcast.lane.b32.xlu0 %v673, 256
        %v676 = vpop.permute.xlu0 %675
        %s678 = sor.u32 256, 8
        %679 = vbcast.lane.b32.xlu0 %v673, %s678
        %v680 = vpop.permute.xlu0 %679
        %s682 = sor.u32 256, 16
        %683 = vbcast.lane.b32.xlu0 %v673, %s682
        %v684 = vpop.permute.xlu0 %683
        %s686 = sor.u32 256, 24
        %687 = vbcast.lane.b32.xlu0 %v673, %s686
        %v688 = vpop.permute.xlu0 %687
        %s690 = sor.u32 256, 32
        %691 = vbcast.lane.b32.xlu0 %v673, %s690
        %v692 = vpop.permute.xlu0 %691
        %s694 = sor.u32 256, 40
        %695 = vbcast.lane.b32.xlu0 %v673, %s694
        %v696 = vpop.permute.xlu0 %695
        %s698 = sor.u32 256, 48
        %699 = vbcast.lane.b32.xlu0 %v673, %s698
        %v700 = vpop.permute.xlu0 %699
        %s702 = sor.u32 256, 56
        %703 = vbcast.lane.b32.xlu0 %v673, %s702
        %v704 = vpop.permute.xlu0 %703
        %v705 = vmul.f32 %v246, %v641
        %v706 = vmul.f32 %v247, %v641
        %v707 = vmul.f32 %v248, %v645
        %v708 = vmul.f32 %v249, %v645
        %v709 = vmul.f32 %v250, %v649
        %v710 = vmul.f32 %v251, %v649
        %v711 = vmul.f32 %v252, %v653
        %v712 = vmul.f32 %v253, %v653
        %v713 = vmul.f32 %v254, %v657
        %v714 = vmul.f32 %v255, %v657
        %v715 = vmul.f32 %v256, %v661
        %v716 = vmul.f32 %v257, %v661
        %v717 = vmul.f32 %v258, %v665
        %v718 = vmul.f32 %v259, %v665
        %v719 = vmul.f32 %v260, %v669
        %v720 = vmul.f32 %v261, %v669
        %v721 = vmul.f32 %v262, %v676
        %v722 = vmul.f32 %v263, %v676
        %v723 = vmul.f32 %v264, %v680
        %v724 = vmul.f32 %v265, %v680
        %v725 = vmul.f32 %v266, %v684
        %v726 = vmul.f32 %v267, %v684
        %v727 = vmul.f32 %v268, %v688
        %v728 = vmul.f32 %v269, %v688
        %v729 = vmul.f32 %v270, %v692
        %v730 = vmul.f32 %v271, %v692
        %v731 = vmul.f32 %v272, %v696
        %v732 = vmul.f32 %v273, %v696
        %v733 = vmul.f32 %v274, %v700
        %v734 = vmul.f32 %v275, %v700
        %v735 = vmul.f32 %v276, %v704
        %v736 = vmul.f32 %v277, %v704
        %737 = vst [vmem:[%s243] sm:$0xff] %v705
        %738 = vst [vmem:[%s243 + $0x8] sm:$0xff] %v706
        %739 = vst [vmem:[%s243 + $0x10] sm:$0xff] %v707
        %740 = vst [vmem:[%s243 + $0x18] sm:$0xff] %v708
        %741 = vst [vmem:[%s243 + $0x20] sm:$0xff] %v709
        %742 = vst [vmem:[%s243 + $0x28] sm:$0xff] %v710
        %743 = vst [vmem:[%s243 + $0x30] sm:$0xff] %v711
        %744 = vst [vmem:[%s243 + $0x38] sm:$0xff] %v712
        %745 = vst [vmem:[%s243 + $0x40] sm:$0xff] %v713
        %746 = vst [vmem:[%s243 + $0x48] sm:$0xff] %v714
        %747 = vst [vmem:[%s243 + $0x50] sm:$0xff] %v715
        %748 = vst [vmem:[%s243 + $0x58] sm:$0xff] %v716
        %749 = vst [vmem:[%s243 + $0x60] sm:$0xff] %v717
        %750 = vst [vmem:[%s243 + $0x68] sm:$0xff] %v718
        %751 = vst [vmem:[%s243 + $0x70] sm:$0xff] %v719
        %752 = vst [vmem:[%s243 + $0x78] sm:$0xff] %v720
        %753 = vst [vmem:[%s243 + $0x80] sm:$0xff] %v721
        %754 = vst [vmem:[%s243 + $0x88] sm:$0xff] %v722
        %755 = vst [vmem:[%s243 + $0x90] sm:$0xff] %v723
        %756 = vst [vmem:[%s243 + $0x98] sm:$0xff] %v724
        %757 = vst [vmem:[%s243 + $0xa0] sm:$0xff] %v725
        %758 = vst [vmem:[%s243 + $0xa8] sm:$0xff] %v726
        %759 = vst [vmem:[%s243 + $0xb0] sm:$0xff] %v727
        %760 = vst [vmem:[%s243 + $0xb8] sm:$0xff] %v728
        %761 = vst [vmem:[%s243 + $0xc0] sm:$0xff] %v729
        %762 = vst [vmem:[%s243 + $0xc8] sm:$0xff] %v730
        %763 = vst [vmem:[%s243 + $0xd0] sm:$0xff] %v731
        %764 = vst [vmem:[%s243 + $0xd8] sm:$0xff] %v732
        %765 = vst [vmem:[%s243 + $0xe0] sm:$0xff] %v733
        %766 = vst [vmem:[%s243 + $0xe8] sm:$0xff] %v734
        %767 = vst [vmem:[%s243 + $0xf0] sm:$0xff] %v735
        %768 = vst [vmem:[%s243 + $0xf8] sm:$0xff] %v736
        %s769 = sand.u32 %s140, 1
        %s770 = scalar_lea.sflag [#allocation4], %s769
        %s771 = sand.u32 %s140, 1
        %s772 = smul.addr %s771, 256
        %s773 = scalar_lea.vmem [#allocation5], %s772
        // Predicated region
        $region45: #{tpu_custom_call.1} parent=39 // pred_check
          %p774 = pneg %p150
        $region46: #{tpu_custom_call.1} parent=39 // pred_check_branch
          %776 = sbr.rel (%p774) target = $region48
        $region47: #{tpu_custom_call.1} parent=39 // pred_region
          %s777 = smul.u32 2, %s22
          %s779 = ssub.s32 4096, 4096
          %780 = vsyncadd %s770, %s779
          %s781 = smul.addr %s777, 16
          %s782 = smul.addr %s781, 128
          %s783 = scalar_lea.hbm %s5, %s782
          %s784 = sshll.u32 %s773, 4
          %s785 = int_to_ptr.vmem [resolvable:$true] %s784
          %790 = dma.vmem_to_hbm [thread:$0]  %s785, 4096, %s783, %s770, 256, 256, 16
        $region48: #{tpu_custom_call.1} parent=39 // pred_fallthru
          _
      $region40: #{tpu_custom_call.1} parent=5 // pred_fallthru
        _
      %p791 = scmp.le.s32.totalorder 2, %s17
      // Predicated region
      $region49: #{tpu_custom_call.1} parent=5 // pred_check
        %p792 = pneg %p791
      $region50: #{tpu_custom_call.1} parent=5 // pred_check_branch
        %794 = sbr.rel (%p792) target = $region52
      $region51: #{tpu_custom_call.1} parent=5 // pred_region
        %s795 = ssub.s32 %s17, 2
        // Predicated region
        $region53: #{tpu_custom_call.1} parent=51 // pred_check
          %p796 = pneg %p156
        $region54: #{tpu_custom_call.1} parent=51 // pred_check_branch
          %798 = sbr.rel (%p796) target = $region56
        $region55: #{tpu_custom_call.1} parent=51 // pred_region
          %s799 = sand.u32 %s141, 1
          %s800 = scalar_lea.sflag [#allocation4], %s799
          %s801 = sand.u32 %s141, 1
          %s802 = smul.addr %s801, 256
          %s803 = scalar_lea.vmem [#allocation5], %s802
          %804 = dma.done %s800, 4096
        $region56: #{tpu_custom_call.1} parent=51 // pred_fallthru
          _
      $region52: #{tpu_custom_call.1} parent=5 // pred_fallthru
        _
    $region6: #{tpu_custom_call.1} parent=1 // loop_footer
      %s21 = sadd.s32 1, %s17
    $region7: #{tpu_custom_call.1} parent=1 // loop_footer_branch
      %16 = sbr.rel target = $region3
    $region8: #{tpu_custom_call.1} parent=1 // loop_exit
      _
    %805 = vsyncpa [#allocation3], 1
    %s806 = scalar_lea.sflag [#allocation3], 1
    %807 = vsyncpa %s806, 1
    %808 = vsyncpa [#allocation4], 1
    %s809 = scalar_lea.sflag [#allocation4], 1
    %810 = vsyncpa %s809, 1

</llo_original>
